<compile_context>
chip_gen: v7x
topology: tpu7x:2x2x1
jax: 0.10.0
libtpu: 0.0.40
codegen_flags: <defaults>
</compile_context>

<pallas_src>
import functools

import jax
import jax.numpy as jnp
from jax import lax
from jax.experimental import pallas as pl
from jax.experimental.pallas import tpu as pltpu


# ---------------------------------------------------------------------------
# Helpers
# ---------------------------------------------------------------------------
def _cdiv(a, b):
    return -(-a // b)


def _round_up(x, m):
    return ((x + m - 1) // m) * m


# VMEM budgeting: keep the double-buffered footprint well under v7x's 64 MiB
# physical VMEM; v5e/v6e (128 MiB physical) are then trivially safe.
_VMEM_BUDGET = 48 * 1024 * 1024       # footprint target for tile shrinking
_VMEM_LIMIT_CAP = 56 * 1024 * 1024    # never ask the compiler for more
_VMEM_LIMIT_FLOOR = 32 * 1024 * 1024  # don't go below the v6e/v7x default


# ---------------------------------------------------------------------------
# Kernels
# ---------------------------------------------------------------------------
def _wmf_kernel_single_k(p_ref, q_ref, o_ref, *, bf16_inputs):
    """One (tm, tn) tile of P @ Q^T with the whole hidden dim in one block.

    p_ref: (tm, K), q_ref: (tn, K).  The contraction over the shared last axis
    is expressed with dot_general, so the MXU consumes the "transposed" RHS
    natively -- no in-kernel XLU transpose, no accumulator scratch.
    """
    a = p_ref[...]
    b = q_ref[...]
    if bf16_inputs:
        a = a.astype(jnp.bfloat16)
        b = b.astype(jnp.bfloat16)
    o_ref[...] = lax.dot_general(
        a,
        b,
        dimension_numbers=(((1,), (1,)), ((), ())),
        preferred_element_type=jnp.float32,
    ).astype(o_ref.dtype)


def _wmf_kernel_k_tiled(p_ref, q_ref, o_ref, *, bf16_inputs):
    """Fallback for large hidden dims: K-tiled, accumulate directly into o_ref.

    The output index_map ignores k, so the o_ref block stays resident in VMEM
    across the whole K axis (no separate f32 accumulator, no final copy).
    """
    k = pl.program_id(2)

    @pl.when(k == 0)
    def _():
        o_ref[...] = jnp.zeros_like(o_ref)

    a = p_ref[...]
    b = q_ref[...]
    if bf16_inputs:
        a = a.astype(jnp.bfloat16)
        b = b.astype(jnp.bfloat16)
    o_ref[...] += lax.dot_general(
        a,
        b,
        dimension_numbers=(((1,), (1,)), ((), ())),
        preferred_element_type=jnp.float32,
    )


# ---------------------------------------------------------------------------
# Wrapper
# ---------------------------------------------------------------------------
@functools.partial(
    jax.jit,
    static_argnames=("tm", "tn", "tk_max", "bf16_inputs", "out_dtype"),
)
def wmf_matmul(p, q, *, tm=1024, tn=1024, tk_max=1024, bf16_inputs=False,
               out_dtype=None):
    """Pallas implementation of  p @ q.T  for p:(M, K), q:(N, K)."""
    M, K = p.shape
    N, K2 = q.shape
    assert K == K2, "hidden dims must match"
    out_dtype = p.dtype if out_dtype is None else jnp.dtype(out_dtype)
    in_bytes = jnp.dtype(p.dtype).itemsize
    out_bytes = jnp.dtype(out_dtype).itemsize

    # Clamp tiles to the problem size at hardware granularity: 8-row sublanes
    # on M, 128 lanes on N.  Non-dividing array shapes are handled by Pallas
    # boundary-block masking (no wrapper pad + post-kernel slice copy).
    tm = max(8, min(tm, _round_up(M, 8)))
    tn = max(128, min(tn, _round_up(N, 128)))

    # v7x has 2 TensorCores sharing the grid across "parallel" axes: ensure at
    # least one parallel axis has >= 2 tiles when the problem allows it.
    if _cdiv(M, tm) * _cdiv(N, tn) == 1:
        if N > 128:
            tn = max(128, _round_up(_cdiv(N, 2), 128))
        elif M > 8:
            tm = max(8, _round_up(_cdiv(M, 2), 8))

    single_k = K <= tk_max
    tk = K if single_k else min(512, _round_up(K, 128))

    def _footprint(tm_, tn_):
        # double-buffered input tiles + double-buffered output tile
        return 2 * (tm_ * tk + tn_ * tk) * in_bytes + 2 * tm_ * tn_ * out_bytes

    # Shrink tiles if the footprint would blow the cross-generation budget.
    while _footprint(tm, tn) > _VMEM_BUDGET and (tm > 8 or tn > 128):
        if tn >= tm and tn > 128:
            tn = max(128, _round_up(tn // 2, 128))
        else:
            tm = max(8, _round_up(tm // 2, 8))

    vmem_limit = int(
        min(_VMEM_LIMIT_CAP,
            max(_VMEM_LIMIT_FLOOR, _footprint(tm, tn) + (8 << 20))))

    grid_m = _cdiv(M, tm)
    grid_n = _cdiv(N, tn)

    if single_k:
        # Common MF regime: whole hidden dim in one block, no K grid axis,
        # dot result written straight to the output tile.
        return pl.pallas_call(
            functools.partial(_wmf_kernel_single_k, bf16_inputs=bf16_inputs),
            out_shape=jax.ShapeDtypeStruct((M, N), out_dtype),
            grid_spec=pltpu.PrefetchScalarGridSpec(
                num_scalar_prefetch=0,
                grid=(grid_m, grid_n),
                in_specs=[
                    pl.BlockSpec((tm, K), lambda i, j: (i, 0)),
                    pl.BlockSpec((tn, K), lambda i, j: (j, 0)),
                ],
                out_specs=pl.BlockSpec((tm, tn), lambda i, j: (i, j)),
            ),
            compiler_params=pltpu.CompilerParams(
                dimension_semantics=("parallel", "parallel"),
                vmem_limit_bytes=vmem_limit,
            ),
        )(p, q)

    # Rare path: hidden dim too large for one block.  Zero-pad K only, so the
    # padded contraction elements contribute exactly 0; M/N stay unpadded.
    Kp = _round_up(K, tk)
    if Kp != K:
        p = jnp.pad(p, ((0, 0), (0, Kp - K)))
        q = jnp.pad(q, ((0, 0), (0, Kp - K)))
    acc_dtype = jnp.float32  # accumulate directly in the f32 output block
    out = pl.pallas_call(
        functools.partial(_wmf_kernel_k_tiled, bf16_inputs=bf16_inputs),
        out_shape=jax.ShapeDtypeStruct((M, N), acc_dtype),
        grid_spec=pltpu.PrefetchScalarGridSpec(
            num_scalar_prefetch=0,
            grid=(grid_m, grid_n, Kp // tk),
            in_specs=[
                pl.BlockSpec((tm, tk), lambda i, j, k: (i, k)),
                pl.BlockSpec((tn, tk), lambda i, j, k: (j, k)),
            ],
            out_specs=pl.BlockSpec((tm, tn), lambda i, j, k: (i, j)),
        ),
        compiler_params=pltpu.CompilerParams(
            dimension_semantics=("parallel", "parallel", "arbitrary"),
            vmem_limit_bytes=vmem_limit,
        ),
    )(p, q)
    return out if jnp.dtype(out_dtype) == jnp.dtype(acc_dtype) else out.astype(out_dtype)


# ---------------------------------------------------------------------------
# Module port
# ---------------------------------------------------------------------------
class WeightedMFPallas:
    """JAX/Pallas port of the PyTorch WeightedMF module."""

    def __init__(self, n_users, n_items, hidden_dim, key):
        self.n_users = n_users
        self.n_items = n_items
        self.dim = hidden_dim
        kq, kp = jax.random.split(key)
        # Both parameters end up ~ N(0, 0.1) after .normal_(mean=0, std=0.1).
        self.Q = 0.1 * jax.random.normal(kq, (n_items, hidden_dim), jnp.float32)
        self.P = 0.1 * jax.random.normal(kp, (n_users, hidden_dim), jnp.float32)

    def forward(self, user_id=None, item_id=None, *, bf16_inputs=False):
        if user_id is None and item_id is None:
            # (n_users, n_items)
            return wmf_matmul(self.P, self.Q, bf16_inputs=bf16_inputs)
        if user_id is not None:
            # P[[user_id]] @ Q^T -> (len(user_id), n_items).  Tiny-M GEMV-like
            # regime: widen tn so the Q stream is covered in fewer grid steps.
            # TODO(synk): for very large id batches, gather P rows inside the
            # kernel via PrefetchScalarGridSpec + pl.Element and deepen the Q
            # pipeline with pipeline_mode=pl.Buffered(3).
            p_sel = self.P[jnp.asarray(user_id, dtype=jnp.int32)]
            return wmf_matmul(p_sel, self.Q, tn=4096, bf16_inputs=bf16_inputs)
        # item_id path: P @ Q[[item_id]]^T -> (n_users, len(item_id)).
        # Computed directly (no operand swap / wrapper transpose): the extra
        # transpose pass over the result would cost more HBM traffic than the
        # masked narrow stores it avoids.
        q_sel = self.Q[jnp.asarray(item_id, dtype=jnp.int32)]
        return wmf_matmul(self.P, q_sel, bf16_inputs=bf16_inputs)

    def get_norm(self, user_id=None, item_id=None):
        # Plain JAX reduction glue (not a hot path).
        p_sel = self.P[jnp.asarray(user_id, dtype=jnp.int32)]
        q_sel = self.Q[jnp.asarray(item_id, dtype=jnp.int32)]
        return (
            jnp.linalg.norm(p_sel, axis=-1).sum()
            + jnp.linalg.norm(q_sel, axis=-1).sum()
        )


if __name__ == "__main__":
    n_users, n_items, hidden_dim = 128, 256, 64

    key = jax.random.PRNGKey(0)
    model = WeightedMFPallas(n_users, n_items, hidden_dim, key)

    # --- full forward: P @ Q^T ---
    out_full = model.forward()
    jax.block_until_ready(out_full)
    ref_full = model.P @ model.Q.T
    assert out_full.shape == (n_users, n_items)
    assert jnp.allclose(out_full, ref_full, atol=1e-4, rtol=1e-4)

    # --- user_id path: P[[uid]] @ Q^T (non-dividing batch size on purpose) ---
    uid = [3, 10, 77]
    out_u = model.forward(user_id=uid)
    jax.block_until_ready(out_u)
    ref_u = model.P[jnp.asarray(uid)] @ model.Q.T
    assert out_u.shape == (len(uid), n_items)
    assert jnp.allclose(out_u, ref_u, atol=1e-4, rtol=1e-4)

    # single-user variant
    out_u1 = model.forward(user_id=[5])
    jax.block_until_ready(out_u1)
    ref_u1 = model.P[jnp.asarray([5])] @ model.Q.T
    assert out_u1.shape == (1, n_items)
    assert jnp.allclose(out_u1, ref_u1, atol=1e-4, rtol=1e-4)

    # --- item_id path: P @ Q[[iid]]^T (narrow output, no wrapper transpose) ---
    iid = [7, 200]
    out_i = model.forward(item_id=iid)
    jax.block_until_ready(out_i)
    ref_i = model.P @ model.Q[jnp.asarray(iid)].T
    assert out_i.shape == (n_users, len(iid))
    assert jnp.allclose(out_i, ref_i, atol=1e-4, rtol=1e-4)

    # single-item variant
    out_i1 = model.forward(item_id=[9])
    jax.block_until_ready(out_i1)
    ref_i1 = model.P @ model.Q[jnp.asarray([9])].T
    assert out_i1.shape == (n_users, 1)
    assert jnp.allclose(out_i1, ref_i1, atol=1e-4, rtol=1e-4)

    # --- bf16-operand mode (f32 accumulate): bandwidth option, looser tol ---
    out_bf16 = model.forward(bf16_inputs=True)
    jax.block_until_ready(out_bf16)
    assert jnp.allclose(out_bf16, ref_full, atol=1e-2, rtol=1e-2)

    # --- K-tiled fallback path (forced via tiny tk_max) ---
    out_kt = wmf_matmul(model.P, model.Q, tk_max=32)
    jax.block_until_ready(out_kt)
    assert jnp.allclose(out_kt, ref_full, atol=1e-4, rtol=1e-4)

    # --- get_norm (plain JAX glue) ---
    nrm = model.get_norm(user_id=uid, item_id=iid)
    jax.block_until_ready(nrm)

    print("KERNEL_OK")
</pallas_src>

<mosaic_0001>
module attributes {stable_mosaic.version = 11 : i64} {
  func.func @_wmf_kernel_single_k(%arg0: i32, %arg1: i32, %arg2: memref<128x64xf32, #tpu.memory_space<vmem>>, %arg3: memref<128x64xf32, #tpu.memory_space<vmem>>, %arg4: memref<128x128xf32, #tpu.memory_space<vmem>>) attributes {dimension_semantics = [#tpu.dimension_semantics<parallel>, #tpu.dimension_semantics<parallel>], iteration_bounds = array<i64: 1, 2>, scalar_prefetch = 0 : i64, scratch_operands = 0 : i64, tpu.core_type = #tpu.core_type<tc>, window_params = [{transform_indices = @transform_0, window_bounds = array<i64: 128, 64>}, {transform_indices = @transform_1, window_bounds = array<i64: 128, 64>}, {transform_indices = @transform_2, window_bounds = array<i64: 128, 128>}]} {
    %c0 = arith.constant 0 : index
    %c0_0 = arith.constant 0 : index
    %0 = vector.load %arg2[%c0, %c0_0] : memref<128x64xf32, #tpu.memory_space<vmem>>, vector<128x64xf32>
    %c0_1 = arith.constant 0 : index
    %c0_2 = arith.constant 0 : index
    %1 = vector.load %arg3[%c0_1, %c0_2] : memref<128x64xf32, #tpu.memory_space<vmem>>, vector<128x64xf32>
    %cst = arith.constant dense<0.000000e+00> : vector<128x128xf32>
    %2 = tpu.matmul %0, %1, %cst {dimension_numbers = #tpu.dot_dimension_numbers<[1], [1], [0], [0], [0, 0, 1, 0], [], []>} : vector<128x64xf32>, vector<128x64xf32>, vector<128x128xf32> -> vector<128x128xf32>
    %c0_3 = arith.constant 0 : index
    %c0_4 = arith.constant 0 : index
    %3 = vector.load %arg4[%c0_3, %c0_4] : memref<128x128xf32, #tpu.memory_space<vmem>>, vector<128x128xf32>
    tpu.vector_store %arg4[%c0_3, %c0_4], %2 {strides = array<i32>} : memref<128x128xf32, #tpu.memory_space<vmem>>, vector<128x128xf32>,
    return
  }
  func.func @transform_0(%arg0: i32, %arg1: i32) -> (i32, i32) {
    %c0_i32 = arith.constant 0 : i32
    %c0_i32_0 = arith.constant 0 : i32
    return %arg0, %c0_i32 : i32, i32
  }
  func.func @transform_1(%arg0: i32, %arg1: i32) -> (i32, i32) {
    %c0_i32 = arith.constant 0 : i32
    %c0_i32_0 = arith.constant 0 : i32
    return %arg1, %c0_i32 : i32, i32
  }
  func.func @transform_2(%arg0: i32, %arg1: i32) -> (i32, i32) {
    %c0_i32 = arith.constant 0 : i32
    return %arg0, %arg1 : i32, i32
  }
}

</mosaic_0001>

<llo_original>
// kernel: wmf_matmul.1
$region0: #{wmf_matmul.1}
  #allocation0 [shape = 'u32[]', space=smem, size = 0x4, offset = 0x4, fixed_abs, tag = 'smem constant byte address 0x4 - core index']
  #allocation1 [shape = 'u32[144,128]{1,0:T(1,128)}', space=vmem, size = 0x12000, scoped, tag = 'internal scratch']
  %s0 = inlined_call_operand.vmem [shape: f32[128,64], index: 0, kind: input, shape index: {}]
  %s1 = inlined_call_operand.vmem [shape: f32[256,64], index: 1, kind: input, shape index: {}]
  %s2 = inlined_call_operand.hbm [shape: f32[128,256], index: 2, kind: output, shape index: {}]
  %s3 = sld [smem:[#allocation0]]
  $region41: #{wmf_matmul.1} parent=0
    _
  %s5 = ssub.s32 1, %s3
  %s6 = scalar_select 0, %s5, %s3
  $region1: #{wmf_matmul.1} parent=0
    #allocation2 [shape = 'u8[131072]{0}', space=vmem, size = 0x20000, scoped, tag = 'output window, operand 0']
    #allocation3 [shape = 's32[2]{0}', space=sflag, size = 0x8, scoped, tag = 'scoped memory for wmf_matmul.1']
    %7 = vsyncpa [#allocation3], 0
    %s8 = scalar_lea.sflag [#allocation3], 1
    %9 = vsyncpa %s8, 0
    loop: start=0, step=1, limit=4
    $region2: #{wmf_matmul.1} parent=1 // loop_pre_header
      _
    $region3: #{wmf_matmul.1} parent=1 // loop_header
      %s11 = sphi 0, %s15
      %p12 = scmp.ge.s32.totalorder %s11, 4
      %s18 = sphi 0, %s30
      %s19 = sphi 0, %s26
      %s20 = sphi 0, %s18
      %s21 = sphi 0, %s19
      %s22 = sphi 0, %s20
      %s23 = sphi 0, %s21
      %s33 = sphi 0, %s35
      %s36 = sphi 0, %s33
      %s37 = sphi 0, %s36
      %s53 = sphi 0, %s37
      %s59 = sphi 0, %s61
      %s62 = sphi 0, %s59
      %s63 = sphi 0, %s62
      %s79 = sphi 0, %s63
      %s87 = sphi 0, %s89
      %s90 = sphi 0, %s87
      %s91 = sphi 0, %s90
      %s107 = sphi 0, %s91
    $region4: #{wmf_matmul.1} parent=1 // loop_header_branch
      %14 = sbr.rel (%p12) target = $region8
    $region5: #{wmf_matmul.1} parent=1 // loop_body
      %s16 = ssub.s32 %s11, 1
      %s17 = ssub.s32 %s11, 2
      %s24 = sadd.s32 1, %s19
      %p25 = scmp.ge.s32.totalorder %s24, 2
      %s26 = scalar_select %p25, 0, %s24
      %s27 = sadd.s32 1, %s18
      %s28 = scalar_select %p25, %s27, %s18
      %p29 = scmp.ge.s32.totalorder %s28, 1
      %s30 = scalar_select %p29, 0, %s28
      %s31 = ssub.s32 %s18, %s30
      %p32 = scmp.eq.s32.totalorder %s31, 0
      %s34 = sadd.s32 %s33, 1
      %s35 = scalar_select %p32, %s33, %s34
      %p38 = pneg %p32
      %p39 = scmp.eq.s32.totalorder %s11, 1
      %p40 = por %p38, %p39
      %p41 = scmp.ne.s32.totalorder %s33, %s36
      %p42 = scmp.eq.s32.totalorder %s11, 0
      %p43 = por %p41, %p42
      %p44 = scmp.ne.s32.totalorder %s33, %s36
      %p45 = scmp.eq.s32.totalorder %s16, 1
      %p46 = por %p44, %p45
      %p47 = scmp.ne.s32.totalorder %s36, %s37
      %p48 = scmp.eq.s32.totalorder %s16, 0
      %p49 = por %p47, %p48
      %p50 = scmp.ne.s32.totalorder %s36, %s37
      %p51 = scmp.eq.s32.totalorder %s17, 1
      %p52 = por %p50, %p51
      %p54 = scmp.ne.s32.totalorder %s37, %s53
      %p55 = scmp.eq.s32.totalorder %s17, 0
      %p56 = por %p54, %p55
      %s57 = ssub.s32 %s19, %s26
      %p58 = scmp.eq.s32.totalorder %s57, 0
      %s60 = sadd.s32 %s59, 1
      %s61 = scalar_select %p58, %s59, %s60
      %p64 = pneg %p58
      %p65 = scmp.eq.s32.totalorder %s11, 1
      %p66 = por %p64, %p65
      %p67 = scmp.ne.s32.totalorder %s59, %s62
      %p68 = scmp.eq.s32.totalorder %s11, 0
      %p69 = por %p67, %p68
      %p70 = scmp.ne.s32.totalorder %s59, %s62
      %p71 = scmp.eq.s32.totalorder %s16, 1
      %p72 = por %p70, %p71
      %p73 = scmp.ne.s32.totalorder %s62, %s63
      %p74 = scmp.eq.s32.totalorder %s16, 0
      %p75 = por %p73, %p74
      %p76 = scmp.ne.s32.totalorder %s62, %s63
      %p77 = scmp.eq.s32.totalorder %s17, 1
      %p78 = por %p76, %p77
      %p80 = scmp.ne.s32.totalorder %s63, %s79
      %p81 = scmp.eq.s32.totalorder %s17, 0
      %p82 = por %p80, %p81
      %s83 = ssub.s32 %s18, %s30
      %s84 = ssub.s32 %s19, %s26
      %s85 = sor.u32 %s83, %s84
      %p86 = scmp.eq.s32.totalorder %s85, 0
      %s88 = sadd.s32 %s87, 1
      %s89 = scalar_select %p86, %s87, %s88
      %p92 = pneg %p86
      %p93 = scmp.eq.s32.totalorder %s11, 1
      %p94 = por %p92, %p93
      %p95 = scmp.ne.s32.totalorder %s87, %s90
      %p96 = scmp.eq.s32.totalorder %s11, 0
      %p97 = por %p95, %p96
      %p98 = scmp.ne.s32.totalorder %s87, %s90
      %p99 = scmp.eq.s32.totalorder %s16, 1
      %p100 = por %p98, %p99
      %p101 = scmp.ne.s32.totalorder %s90, %s91
      %p102 = scmp.eq.s32.totalorder %s16, 0
      %p103 = por %p101, %p102
      %p104 = scmp.ne.s32.totalorder %s90, %s91
      %p105 = scmp.eq.s32.totalorder %s17, 1
      %p106 = por %p104, %p105
      %p108 = scmp.ne.s32.totalorder %s91, %s107
      %p109 = scmp.eq.s32.totalorder %s17, 0
      %p110 = por %p108, %p109
      %p111 = scmp.le.s32.totalorder 1, %s11
      %p112 = scmp.lt.s32.totalorder %s11, 3
      %p113 = pnand %p111, %p112
      %p114 = pneg %p113
      // Predicated region
      $region9: #{wmf_matmul.1} parent=5 // pred_check
        _
      $region10: #{wmf_matmul.1} parent=5 // pred_check_branch
        %116 = sbr.rel (%p113) target = $region12
      $region11: #{wmf_matmul.1} parent=5 // pred_region
        %s117 = ssub.s32 %s11, 1
        // Predicated region
        $region13: #{wmf_matmul.1} parent=11 // pred_check
          %p118 = pneg %p49
        $region14: #{wmf_matmul.1} parent=11 // pred_check_branch
          %120 = sbr.rel (%p118) target = $region16
        $region15: #{wmf_matmul.1} parent=11 // pred_region
          %s121 = smul.u32 16, %s20
          %p122 = scmp.lt.s32.totalorder %s121, 15
          %s123 = scalar_select %p122, %s121, 15
          %s124 = smul.addr %s123, 8
          %s125 = scalar_lea.vmem %s0, %s124
          %s126 = smul.u32 16, %s20
        $region16: #{wmf_matmul.1} parent=11 // pred_fallthru
          _
      $region12: #{wmf_matmul.1} parent=5 // pred_fallthru
        _
      %p127 = scmp.lt.s32.totalorder %s11, 2
      // Predicated region
      $region17: #{wmf_matmul.1} parent=5 // pred_check
        %p128 = pneg %p127
      $region18: #{wmf_matmul.1} parent=5 // pred_check_branch
        %130 = sbr.rel (%p128) target = $region20
      $region19: #{wmf_matmul.1} parent=5 // pred_region
        // Predicated region
        $region21: #{wmf_matmul.1} parent=19 // pred_check
          %p131 = pneg %p69
        $region22: #{wmf_matmul.1} parent=19 // pred_check_branch
          %133 = sbr.rel (%p131) target = $region24
        $region23: #{wmf_matmul.1} parent=19 // pred_region
          %s134 = smul.u32 16, %s19
          %p135 = scmp.lt.s32.totalorder %s134, 31
          %s136 = scalar_select %p135, %s134, 31
          %s137 = smul.addr %s136, 8
          %s138 = scalar_lea.vmem %s1, %s137
          %s139 = smul.u32 16, %s19
        $region24: #{wmf_matmul.1} parent=19 // pred_fallthru
          _
      $region20: #{wmf_matmul.1} parent=5 // pred_fallthru
        _
      %p140 = scmp.le.s32.totalorder 1, %s11
      %p141 = scmp.lt.s32.totalorder %s11, 3
      %p142 = pnand %p140, %p141
      %p143 = pneg %p142
      // Predicated region
      $region25: #{wmf_matmul.1} parent=5 // pred_check
        _
      $region26: #{wmf_matmul.1} parent=5 // pred_check_branch
        %145 = sbr.rel (%p142) target = $region28
      $region27: #{wmf_matmul.1} parent=5 // pred_region
        %s146 = ssub.s32 %s11, 1
        %s147 = smul.u32 16, %s20
        %p148 = scmp.lt.s32.totalorder %s147, 15
        %s149 = scalar_select %p148, %s147, 15
        %s150 = smul.addr %s149, 8
        %s151 = scalar_lea.vmem %s0, %s150
        %p152 = pneg %p49
        %p153 = pneg %p46
        %s154 = smul.u32 16, %s21
        %p155 = scmp.lt.s32.totalorder %s154, 31
        %s156 = scalar_select %p155, %s154, 31
        %s157 = smul.addr %s156, 8
        %s158 = scalar_lea.vmem %s1, %s157
        %p159 = pneg %p75
        %p160 = pneg %p72
        %p161 = pneg %p103
        %p162 = pneg %p100
        %s163 = sand.u32 %s90, 1
        %s164 = scalar_lea.sflag [#allocation3], %s163
        %s165 = sand.u32 %s90, 1
        %s166 = smul.addr %s165, 128
        %s167 = scalar_lea.vmem [#allocation2], %s166
        %s168 = smul.u32 16, %s20
        %p169 = scmp.lt.s32.totalorder %s168, 15
        %s170 = scalar_select %p169, %s168, 15
        %s171 = smul.addr %s170, 8
        %s172 = scalar_lea.vmem %s0, %s171
        %s173 = smul.u32 16, %s20
        %s174 = smul.u32 16, %s21
        %p175 = scmp.lt.s32.totalorder %s174, 31
        %s176 = scalar_select %p175, %s174, 31
        %s177 = smul.addr %s176, 8
        %s178 = scalar_lea.vmem %s1, %s177
        %s179 = smul.u32 16, %s21
        %s180 = smul.u32 16, %s20
        %v181 = vld [vmem:[%s172] sm:$0xff]
        %v182 = vld [vmem:[%s172 + $0x8] sm:$0xff]
        %v183 = vld [vmem:[%s172 + $0x10] sm:$0xff]
        %v184 = vld [vmem:[%s172 + $0x18] sm:$0xff]
        %v185 = vld [vmem:[%s172 + $0x20] sm:$0xff]
        %v186 = vld [vmem:[%s172 + $0x28] sm:$0xff]
        %v187 = vld [vmem:[%s172 + $0x30] sm:$0xff]
        %v188 = vld [vmem:[%s172 + $0x38] sm:$0xff]
        %v189 = vld [vmem:[%s172 + $0x40] sm:$0xff]
        %v190 = vld [vmem:[%s172 + $0x48] sm:$0xff]
        %v191 = vld [vmem:[%s172 + $0x50] sm:$0xff]
        %v192 = vld [vmem:[%s172 + $0x58] sm:$0xff]
        %v193 = vld [vmem:[%s172 + $0x60] sm:$0xff]
        %v194 = vld [vmem:[%s172 + $0x68] sm:$0xff]
        %v195 = vld [vmem:[%s172 + $0x70] sm:$0xff]
        %v196 = vld [vmem:[%s172 + $0x78] sm:$0xff]
        %v197 = vld [vmem:[%s178] sm:$0xff]
        %v198 = vld [vmem:[%s178 + $0x8] sm:$0xff]
        %v199 = vld [vmem:[%s178 + $0x10] sm:$0xff]
        %v200 = vld [vmem:[%s178 + $0x18] sm:$0xff]
        %v201 = vld [vmem:[%s178 + $0x20] sm:$0xff]
        %v202 = vld [vmem:[%s178 + $0x28] sm:$0xff]
        %v203 = vld [vmem:[%s178 + $0x30] sm:$0xff]
        %v204 = vld [vmem:[%s178 + $0x38] sm:$0xff]
        %v205 = vld [vmem:[%s178 + $0x40] sm:$0xff]
        %v206 = vld [vmem:[%s178 + $0x48] sm:$0xff]
        %v207 = vld [vmem:[%s178 + $0x50] sm:$0xff]
        %v208 = vld [vmem:[%s178 + $0x58] sm:$0xff]
        %v209 = vld [vmem:[%s178 + $0x60] sm:$0xff]
        %v210 = vld [vmem:[%s178 + $0x68] sm:$0xff]
        %v211 = vld [vmem:[%s178 + $0x70] sm:$0xff]
        %v212 = vld [vmem:[%s178 + $0x78] sm:$0xff]
        %vm213 = vcmask 523264
        %v215 = vsel %vm213, %v181, 0
        %v218 = vsel %vm213, %v182, 0
        %v221 = vsel %vm213, %v183, 0
        %v224 = vsel %vm213, %v184, 0
        %v227 = vsel %vm213, %v185, 0
        %v230 = vsel %vm213, %v186, 0
        %v233 = vsel %vm213, %v187, 0
        %v236 = vsel %vm213, %v188, 0
        %v239 = vsel %vm213, %v189, 0
        %v242 = vsel %vm213, %v190, 0
        %v245 = vsel %vm213, %v191, 0
        %v248 = vsel %vm213, %v192, 0
        %v251 = vsel %vm213, %v193, 0
        %v254 = vsel %vm213, %v194, 0
        %v257 = vsel %vm213, %v195, 0
        %v260 = vsel %vm213, %v196, 0
        %v263 = vsel %vm213, %v197, 0
        %v266 = vsel %vm213, %v198, 0
        %v269 = vsel %vm213, %v199, 0
        %v272 = vsel %vm213, %v200, 0
        %v275 = vsel %vm213, %v201, 0
        %v278 = vsel %vm213, %v202, 0
        %v281 = vsel %vm213, %v203, 0
        %v284 = vsel %vm213, %v204, 0
        %v287 = vsel %vm213, %v205, 0
        %v290 = vsel %vm213, %v206, 0
        %v293 = vsel %vm213, %v207, 0
        %v296 = vsel %vm213, %v208, 0
        %v299 = vsel %vm213, %v209, 0
        %v302 = vsel %vm213, %v210, 0
        %v305 = vsel %vm213, %v211, 0
        %v308 = vsel %vm213, %v212, 0
        %310 = vmatprep.subr.mxu0 0.0
        %311 = vmatpush1.xpose.msra.mxu0 %v263
        %312 = vmatprep.subr.mxu0 0.0
        %313 = vmatpush1.xpose.msra.mxu0 %v266
        %314 = vmatprep.subr.mxu0 0.0
        %315 = vmatpush1.xpose.msra.mxu0 %v269
        %316 = vmatprep.subr.mxu0 0.0
        %317 = vmatpush1.xpose.msra.mxu0 %v272
        %318 = vmatprep.subr.mxu0 0.0
        %319 = vmatpush1.xpose.msra.mxu0 %v275
        %320 = vmatprep.subr.mxu0 0.0
        %321 = vmatpush1.xpose.msra.mxu0 %v278
        %322 = vmatprep.subr.mxu0 0.0
        %323 = vmatpush1.xpose.msra.mxu0 %v281
        %324 = vmatprep.subr.mxu0 0.0
        %325 = vmatpush1.xpose.msra.mxu0 %v284
        %326 = vmatprep.subr.mxu0 0.0
        %327 = vmatpush1.xpose.msra.mxu0 %v287
        %328 = vmatprep.subr.mxu0 0.0
        %329 = vmatpush1.xpose.msra.mxu0 %v290
        %330 = vmatprep.subr.mxu0 0.0
        %331 = vmatpush1.xpose.msra.mxu0 %v293
        %332 = vmatprep.subr.mxu0 0.0
        %333 = vmatpush1.xpose.msra.mxu0 %v296
        %334 = vmatprep.subr.mxu0 0.0
        %335 = vmatpush1.xpose.msra.mxu0 %v299
        %336 = vmatprep.subr.mxu0 0.0
        %337 = vmatpush1.xpose.msra.mxu0 %v302
        %338 = vmatprep.subr.mxu0 0.0
        %339 = vmatpush1.xpose.msra.mxu0 %v305
        %340 = vmatprep.subr.mxu0 0.0
        %341 = vmatpush1.xpose.msra.mxu0 %v308
        %342 = vmatprep.subr.mxu0 0.0
        %343 = vmatpush1.xpose.msra.mxu0 0.0
        %344 = vmatprep.subr.mxu0 0.0
        %345 = vmatpush1.xpose.msra.mxu0 0.0
        %346 = vmatprep.subr.mxu0 0.0
        %347 = vmatpush1.xpose.msra.mxu0 0.0
        %348 = vmatprep.subr.mxu0 0.0
        %349 = vmatpush1.xpose.msra.mxu0 0.0
        %350 = vmatprep.subr.mxu0 0.0
        %351 = vmatpush1.xpose.msra.mxu0 0.0
        %352 = vmatprep.subr.mxu0 0.0
        %353 = vmatpush1.xpose.msra.mxu0 0.0
        %354 = vmatprep.subr.mxu0 0.0
        %355 = vmatpush1.xpose.msra.mxu0 0.0
        %356 = vmatprep.subr.mxu0 0.0
        %357 = vmatpush1.xpose.msra.mxu0 0.0
        %358 = vmatprep.subr.mxu0 0.0
        %359 = vmatpush1.xpose.msra.mxu0 0.0
        %360 = vmatprep.subr.mxu0 0.0
        %361 = vmatpush1.xpose.msra.mxu0 0.0
        %362 = vmatprep.subr.mxu0 0.0
        %363 = vmatpush1.xpose.msra.mxu0 0.0
        %364 = vmatprep.subr.mxu0 0.0
        %365 = vmatpush1.xpose.msra.mxu0 0.0
        %366 = vmatprep.subr.mxu0 0.0
        %367 = vmatpush1.xpose.msra.mxu0 0.0
        %368 = vmatprep.subr.mxu0 0.0
        %369 = vmatpush1.xpose.msra.mxu0 0.0
        %370 = vmatprep.subr.mxu0 0.0
        %371 = vmatpush1.xpose.msra.mxu0 0.0
        %372 = vmatprep.subr.mxu0 0.0
        %373 = vmatpush1.xpose.msra.mxu0 0.0
        %374 = vmatprep.mubr.f32.mxu0 0.0
        %375 = vmatmul.mubr.f32.gmra.mrb[0].mxu0 %v215
        %v376 = vpop.f32.mrb[0].mxu0
        %v377 = vadd.f32 0.0, %v376
        %v378 = vpop.f32.mrb[0].mxu0
        %379 = vmatprep.mubr.f32.mxu0 0.0
        %380 = vmatmul.mubr.f32.gmra.mrb[0].mxu0 %v218
        %v381 = vpop.f32.mrb[0].mxu0
        %v382 = vadd.f32 0.0, %v381
        %v383 = vpop.f32.mrb[0].mxu0
        %384 = vmatprep.mubr.f32.mxu0 0.0
        %385 = vmatmul.mubr.f32.gmra.mrb[0].mxu0 %v221
        %v386 = vpop.f32.mrb[0].mxu0
        %v387 = vadd.f32 0.0, %v386
        %v388 = vpop.f32.mrb[0].mxu0
        %389 = vmatprep.mubr.f32.mxu0 0.0
        %390 = vmatmul.mubr.f32.gmra.mrb[0].mxu0 %v224
        %v391 = vpop.f32.mrb[0].mxu0
        %v392 = vadd.f32 0.0, %v391
        %v393 = vpop.f32.mrb[0].mxu0
        %394 = vmatprep.mubr.f32.mxu0 0.0
        %395 = vmatmul.mubr.f32.gmra.mrb[0].mxu0 %v227
        %v396 = vpop.f32.mrb[0].mxu0
        %v397 = vadd.f32 0.0, %v396
        %v398 = vpop.f32.mrb[0].mxu0
        %399 = vmatprep.mubr.f32.mxu0 0.0
        %400 = vmatmul.mubr.f32.gmra.mrb[0].mxu0 %v230
        %v401 = vpop.f32.mrb[0].mxu0
        %v402 = vadd.f32 0.0, %v401
        %v403 = vpop.f32.mrb[0].mxu0
        %404 = vmatprep.mubr.f32.mxu0 0.0
        %405 = vmatmul.mubr.f32.gmra.mrb[0].mxu0 %v233
        %v406 = vpop.f32.mrb[0].mxu0
        %v407 = vadd.f32 0.0, %v406
        %v408 = vpop.f32.mrb[0].mxu0
        %409 = vmatprep.mubr.f32.mxu0 0.0
        %410 = vmatmul.mubr.f32.gmra.mrb[0].mxu0 %v236
        %v411 = vpop.f32.mrb[0].mxu0
        %v412 = vadd.f32 0.0, %v411
        %v413 = vpop.f32.mrb[0].mxu0
        %414 = vmatprep.mubr.f32.mxu0 0.0
        %415 = vmatmul.mubr.f32.gmra.mrb[0].mxu0 %v239
        %v416 = vpop.f32.mrb[0].mxu0
        %v417 = vadd.f32 0.0, %v416
        %v418 = vpop.f32.mrb[0].mxu0
        %419 = vmatprep.mubr.f32.mxu0 0.0
        %420 = vmatmul.mubr.f32.gmra.mrb[0].mxu0 %v242
        %v421 = vpop.f32.mrb[0].mxu0
        %v422 = vadd.f32 0.0, %v421
        %v423 = vpop.f32.mrb[0].mxu0
        %424 = vmatprep.mubr.f32.mxu0 0.0
        %425 = vmatmul.mubr.f32.gmra.mrb[0].mxu0 %v245
        %v426 = vpop.f32.mrb[0].mxu0
        %v427 = vadd.f32 0.0, %v426
        %v428 = vpop.f32.mrb[0].mxu0
        %429 = vmatprep.mubr.f32.mxu0 0.0
        %430 = vmatmul.mubr.f32.gmra.mrb[0].mxu0 %v248
        %v431 = vpop.f32.mrb[0].mxu0
        %v432 = vadd.f32 0.0, %v431
        %v433 = vpop.f32.mrb[0].mxu0
        %434 = vmatprep.mubr.f32.mxu0 0.0
        %435 = vmatmul.mubr.f32.gmra.mrb[0].mxu0 %v251
        %v436 = vpop.f32.mrb[0].mxu0
        %v437 = vadd.f32 0.0, %v436
        %v438 = vpop.f32.mrb[0].mxu0
        %439 = vmatprep.mubr.f32.mxu0 0.0
        %440 = vmatmul.mubr.f32.gmra.mrb[0].mxu0 %v254
        %v441 = vpop.f32.mrb[0].mxu0
        %v442 = vadd.f32 0.0, %v441
        %v443 = vpop.f32.mrb[0].mxu0
        %444 = vmatprep.mubr.f32.mxu0 0.0
        %445 = vmatmul.mubr.f32.gmra.mrb[0].mxu0 %v257
        %v446 = vpop.f32.mrb[0].mxu0
        %v447 = vadd.f32 0.0, %v446
        %v448 = vpop.f32.mrb[0].mxu0
        %449 = vmatprep.mubr.f32.mxu0 0.0
        %450 = vmatmul.mubr.f32.gmra.mrb[0].mxu0 %v260
        %v451 = vpop.f32.mrb[0].mxu0
        %v452 = vadd.f32 0.0, %v451
        %v453 = vpop.f32.mrb[0].mxu0
        %454 = vdwg.mxu0
        %455 = vst [vmem:[%s167] sm:$0xff] %v377
        %456 = vst [vmem:[%s167 + $0x8] sm:$0xff] %v382
        %457 = vst [vmem:[%s167 + $0x10] sm:$0xff] %v387
        %458 = vst [vmem:[%s167 + $0x18] sm:$0xff] %v392
        %459 = vst [vmem:[%s167 + $0x20] sm:$0xff] %v397
        %460 = vst [vmem:[%s167 + $0x28] sm:$0xff] %v402
        %461 = vst [vmem:[%s167 + $0x30] sm:$0xff] %v407
        %462 = vst [vmem:[%s167 + $0x38] sm:$0xff] %v412
        %463 = vst [vmem:[%s167 + $0x40] sm:$0xff] %v417
        %464 = vst [vmem:[%s167 + $0x48] sm:$0xff] %v422
        %465 = vst [vmem:[%s167 + $0x50] sm:$0xff] %v427
        %466 = vst [vmem:[%s167 + $0x58] sm:$0xff] %v432
        %467 = vst [vmem:[%s167 + $0x60] sm:$0xff] %v437
        %468 = vst [vmem:[%s167 + $0x68] sm:$0xff] %v442
        %469 = vst [vmem:[%s167 + $0x70] sm:$0xff] %v447
        %470 = vst [vmem:[%s167 + $0x78] sm:$0xff] %v452
        %s471 = sand.u32 %s90, 1
        %s472 = scalar_lea.sflag [#allocation3], %s471
        %s473 = sand.u32 %s90, 1
        %s474 = smul.addr %s473, 128
        %s475 = scalar_lea.vmem [#allocation2], %s474
        // Predicated region
        $region29: #{wmf_matmul.1} parent=27 // pred_check
          %p476 = pneg %p100
        $region30: #{wmf_matmul.1} parent=27 // pred_check_branch
          %478 = sbr.rel (%p476) target = $region32
        $region31: #{wmf_matmul.1} parent=27 // pred_region
          %s479 = smul.u32 16, %s20
          %s481 = ssub.s32 2048, 2048
          %482 = vsyncadd %s472, %s481
          %s483 = smul.addr %s479, 2
          %s484 = sadd.s32 %s21, %s483
          %s485 = smul.addr %s484, 128
          %s486 = scalar_lea.hbm %s2, %s485
          %s487 = sshll.u32 %s475, 4
          %s488 = int_to_ptr.vmem [resolvable:$true] %s487
          %493 = dma.vmem_to_hbm [thread:$0]  %s488, 2048, %s486, %s472, 128, 256, 8
        $region32: #{wmf_matmul.1} parent=27 // pred_fallthru
          _
      $region28: #{wmf_matmul.1} parent=5 // pred_fallthru
        _
      %p494 = scmp.le.s32.totalorder 2, %s11
      // Predicated region
      $region33: #{wmf_matmul.1} parent=5 // pred_check
        %p495 = pneg %p494
      $region34: #{wmf_matmul.1} parent=5 // pred_check_branch
        %497 = sbr.rel (%p495) target = $region36
      $region35: #{wmf_matmul.1} parent=5 // pred_region
        %s498 = ssub.s32 %s11, 2
        // Predicated region
        $region37: #{wmf_matmul.1} parent=35 // pred_check
          %p499 = pneg %p106
        $region38: #{wmf_matmul.1} parent=35 // pred_check_branch
          %501 = sbr.rel (%p499) target = $region40
        $region39: #{wmf_matmul.1} parent=35 // pred_region
          %s502 = sand.u32 %s91, 1
          %s503 = scalar_lea.sflag [#allocation3], %s502
          %s504 = sand.u32 %s91, 1
          %s505 = smul.addr %s504, 128
          %s506 = scalar_lea.vmem [#allocation2], %s505
          %507 = dma.done %s503, 2048
        $region40: #{wmf_matmul.1} parent=35 // pred_fallthru
          _
      $region36: #{wmf_matmul.1} parent=5 // pred_fallthru
        _
    $region6: #{wmf_matmul.1} parent=1 // loop_footer
      %s15 = sadd.s32 1, %s11
    $region7: #{wmf_matmul.1} parent=1 // loop_footer_branch
      %10 = sbr.rel target = $region3
    $region8: #{wmf_matmul.1} parent=1 // loop_exit
      _
    %508 = vsyncpa [#allocation3], 1
    %s509 = scalar_lea.sflag [#allocation3], 1
    %510 = vsyncpa %s509, 1

</llo_original>
